<compile_context>
chip_gen: v6e
topology: v6e:2x2x1
jax: 0.10.0
libtpu: 0.0.40
codegen_flags: <defaults>
</compile_context>

<pallas_src>
import jax
import jax.numpy as jnp
from jax.experimental import pallas as pl
from jax.experimental.pallas import tpu as pltpu

_LANES = 128
_K0 = 4096            # lane-chunk width for in-kernel accumulation / MXU dots
_MAX_CHUNKS = 32      # bounds the in-kernel unroll (tile_s <= _MAX_CHUNKS*_K0)


def _round_up(v, m):
    return ((v + m - 1) // m) * m


def _hw_vmem_bytes():
    try:
        info = pltpu.get_tpu_info()
        v = getattr(info, "vmem_capacity_bytes", None)
        if v:
            return int(v)
    except Exception:
        pass
    return 64 << 20  # conservative default (v7x-sized VMEM)


def _choose_tile_s(C, S, itemsize, target_block_bytes):
    """Lane tile: multiple of 128, ~target_block_bytes per block, <= padded S."""
    s_pad = _round_up(S, _LANES)
    t = target_block_bytes // max(1, C * itemsize)
    t = max(512, (t // _LANES) * _LANES)
    t = min(t, _MAX_CHUNKS * _K0)
    return min(t, s_pad)


def _make_kernel(C, S, tile_s, grid_s, k0, use_mxu_sum):
    rem = S - (grid_s - 1) * tile_s        # valid elements in the last S-tile
    needs_mask = rem < tile_s
    inv_s = 1.0 / float(S)
    n_chunks = -(-tile_s // k0)
    chunks = [(j * k0, min(k0, tile_s - j * k0)) for j in range(n_chunks)]

    def kernel(*refs):
        if use_mxu_sum:
            x_ref, w1_ref, w2_ref, sel_ref, o_ref, sum_ref, max_ref = refs
        else:
            x_ref, w1_ref, w2_ref, o_ref, sum_ref, max_ref = refs
            sel_ref = None

        s = pl.program_id(1)
        last = grid_s - 1

        @pl.when(s == 0)
        def _init():
            sum_ref[...] = jnp.zeros_like(sum_ref)
            max_ref[...] = jnp.full_like(max_ref, -jnp.inf)

        def accumulate(masked):
            for lo, k_len in chunks:
                if masked and lo >= rem:
                    break                              # fully out-of-range chunks
                chunk = x_ref[0, :, lo:lo + k_len]     # (C, k_len), input dtype
                if masked and lo + k_len > rem:
                    lane = jax.lax.broadcasted_iota(jnp.int32, chunk.shape, 1)
                    valid = lane < (rem - lo)
                    chunk_s = jnp.where(valid, chunk, jnp.zeros_like(chunk))
                    chunk_m = jnp.where(valid, chunk,
                                        jnp.full_like(chunk, -jnp.inf))
                else:
                    chunk_s = chunk
                    chunk_m = chunk
                # running max: elementwise, lane-wide, input dtype (exact).
                max_ref[:, 0:k_len] = jnp.maximum(max_ref[:, 0:k_len], chunk_m)
                # running sum: f32, on the MXU (bf16-ish, C>=64) or the VPU.
                if use_mxu_sum:
                    sum_ref[...] += jnp.dot(chunk_s, sel_ref[0:k_len, :],
                                            preferred_element_type=jnp.float32)
                else:
                    sum_ref[:, 0:k_len] += chunk_s.astype(jnp.float32)

        def finalize():
            sum_col = jnp.sum(sum_ref[...], axis=-1, keepdims=True)       # (C,1)
            max_col = jnp.max(max_ref[...].astype(jnp.float32),
                              axis=-1, keepdims=True)                     # (C,1)
            avg_col = sum_col * inv_s                                     # true-S mean
            w1 = w1_ref[...]                                              # (Cr, C)
            h = (jnp.maximum(jnp.dot(w1, avg_col,
                                     preferred_element_type=jnp.float32), 0.0) +
                 jnp.maximum(jnp.dot(w1, max_col,
                                     preferred_element_type=jnp.float32), 0.0))
            # linearity of layer 2: mlp2(h_avg) + mlp2(h_max) == mlp2(h_avg+h_max)
            out = jnp.dot(w2_ref[...], h,
                          preferred_element_type=jnp.float32)             # (C,1)
            o_ref[0] = jax.nn.sigmoid(out).astype(o_ref.dtype)

        if needs_mask and grid_s > 1:
            @pl.when(s != last)
            def _steady():
                accumulate(False)

            @pl.when(s == last)
            def _tail():
                accumulate(True)
                finalize()
        elif needs_mask:                    # single (ragged) tile
            accumulate(True)
            finalize()
        else:
            accumulate(False)

            @pl.when(s == last)
            def _fin():
                finalize()

    return kernel


def time_attention(x, w1, w2, *, tile_s=None, use_mxu_sum=None):
    """x: (N, C, D, H, W); w1: (C//r, C); w2: (C, C//r). Returns (N, C, 1, 1, 1) f32."""
    N, C, D, H, W = x.shape
    S = D * H * W
    Cr = w1.shape[0]
    assert w1.shape == (Cr, C) and w2.shape == (C, Cr), (w1.shape, w2.shape)

    x_flat = x.reshape(N, C, S)                   # free reshape, keeps input dtype
    w1f = w1.astype(jnp.float32)                  # (Cr, C), resident
    w2f = w2.astype(jnp.float32)                  # (C, Cr), resident

    itemsize = jnp.dtype(x_flat.dtype).itemsize
    subword_float = jnp.issubdtype(x_flat.dtype, jnp.floating) and itemsize < 4
    if use_mxu_sum is None:
        # MXU RHS pushes amortize over the channel (M) dim; below ~64 rows the
        # extra pushes outweigh the saved VPU casts/adds.
        use_mxu_sum = bool(subword_float and C >= 64)
    else:
        use_mxu_sum = bool(use_mxu_sum and subword_float)

    vmem_cap = _hw_vmem_bytes()
    target_block = (12 << 20) if vmem_cap >= (100 << 20) else (8 << 20)
    if tile_s is None:
        tile_s = _choose_tile_s(C, S, itemsize, target_block)
    assert tile_s % _LANES == 0, "tile_s must be a multiple of 128"
    grid_s = pl.cdiv(S, tile_s)
    k0 = min(_K0, tile_s)

    kernel = _make_kernel(C, S, tile_s, grid_s, k0, use_mxu_sum)

    in_specs = [
        pl.BlockSpec((1, C, tile_s), lambda n, s: (n, 0, s)),   # streamed x tile
        pl.BlockSpec((Cr, C), lambda n, s: (0, 0)),             # resident weights
        pl.BlockSpec((C, Cr), lambda n, s: (0, 0)),
    ]
    args = [x_flat, w1f, w2f]
    if use_mxu_sum:
        # Lane selector: sel[i, l] = (i % 128 == l) -> the MXU emits per-lane
        # partial sums (exact: products are x*{0,1}, f32 accumulation).
        sel = (jnp.arange(k0)[:, None] % _LANES ==
               jnp.arange(_LANES)[None, :]).astype(x_flat.dtype)
        in_specs.append(pl.BlockSpec((k0, _LANES), lambda n, s: (0, 0)))
        args.append(sel)

    sum_w = _LANES if use_mxu_sum else k0
    scratch_shapes = [
        pltpu.VMEM((C, sum_w), jnp.float32),      # lane-wide running sum (f32)
        pltpu.VMEM((C, k0), x_flat.dtype),        # lane-wide running max (input dtype)
    ]

    # Need-based VMEM budget, capped to 3/4 of this generation's capacity.
    in_block_bytes = C * tile_s * itemsize
    sel_bytes = k0 * _LANES * itemsize if use_mxu_sum else 0
    w_bytes = (Cr * C + C * Cr) * 4
    scratch_bytes = C * sum_w * 4 + C * k0 * itemsize
    need = 2 * in_block_bytes + 2 * (sel_bytes + w_bytes + C * 4) + scratch_bytes
    vmem_limit = int(min(max(need + (4 << 20), 16 << 20), (vmem_cap * 3) // 4))

    out3 = pl.pallas_call(
        kernel,
        out_shape=jax.ShapeDtypeStruct((N, C, 1), jnp.float32),
        grid_spec=pltpu.PrefetchScalarGridSpec(
            num_scalar_prefetch=0,
            grid=(N, grid_s),
            in_specs=in_specs,
            out_specs=pl.BlockSpec((1, C, 1), lambda n, s: (n, 0, 0)),
            scratch_shapes=scratch_shapes,
        ),
        compiler_params=pltpu.CompilerParams(
            dimension_semantics=("parallel", "arbitrary"),
            vmem_limit_bytes=vmem_limit,
        ),
    )(*args)

    return out3.reshape(N, C, 1, 1, 1)


def time_attention_ref(x, w1, w2):
    """Pure-JAX reference matching the PyTorch module."""
    xf = x.astype(jnp.float32)
    avg = jnp.mean(xf, axis=(2, 3, 4))            # (N, C)
    mx = jnp.max(xf, axis=(2, 3, 4))              # (N, C)

    def mlp(v):
        return jnp.maximum(v @ w1.T, 0.0) @ w2.T  # Conv(1x1x1) -> ReLU -> Conv(1x1x1)

    out = jax.nn.sigmoid(mlp(avg) + mlp(mx))
    return out.reshape(*out.shape, 1, 1, 1)


def _check(name, got, want, tol):
    assert got.shape == want.shape, (name, got.shape, want.shape)
    err = float(jnp.max(jnp.abs(got - want)))
    assert err <= tol, (name, err)


if __name__ == "__main__":
    key = jax.random.PRNGKey(0)
    kx, k1, k2, kx2, k3, k4, kx3 = jax.random.split(key, 7)

    # ---- small-C config (module style: in_planes=8, ratio=4) ----
    N, C, ratio = 2, 8, 4
    Cr = C // ratio
    w1 = jax.random.normal(k1, (Cr, C), dtype=jnp.float32) * 0.1   # Conv3d-1 weight
    w2 = jax.random.normal(k2, (C, Cr), dtype=jnp.float32) * 0.1   # Conv3d-2 weight

    x1 = jax.random.normal(kx, (N, C, 4, 8, 8), dtype=jnp.float32)   # S = 256
    ref1 = time_attention_ref(x1, w1, w2)

    # 1) auto tile (single S tile), f32 / VPU path.
    _check("case1", jax.block_until_ready(time_attention(x1, w1, w2)), ref1, 1e-5)

    # 2) multi-tile streaming reduction (tile_s=128 -> 2 S tiles, no masking).
    _check("case2", jax.block_until_ready(time_attention(x1, w1, w2, tile_s=128)),
           ref1, 1e-5)

    # 3) ragged last tile (S = 3*6*10 = 180, tile_s=128 -> masked tail tile only).
    x3 = jax.random.normal(kx2, (N, C, 3, 6, 10), dtype=jnp.float32)
    _check("case3", jax.block_until_ready(time_attention(x3, w1, w2, tile_s=128)),
           time_attention_ref(x3, w1, w2), 1e-5)

    # 4) bf16 input, small C -> VPU sum fallback (accumulation stays f32).
    x4 = x1.astype(jnp.bfloat16)
    _check("case4", jax.block_until_ready(time_attention(x4, w1, w2)),
           time_attention_ref(x4, w1, w2), 1e-4)

    # ---- larger-C config to exercise the MXU-sum path ----
    Cb, Crb = 64, 16
    w1b = jax.random.normal(k3, (Crb, Cb), dtype=jnp.float32) * 0.1
    w2b = jax.random.normal(k4, (Cb, Crb), dtype=jnp.float32) * 0.1

    # 5) bf16, C=64, S=4608 -> single tile, two MXU chunks (4096 + 512).
    x5 = jax.random.normal(kx3, (1, Cb, 8, 24, 24), dtype=jnp.bfloat16)
    _check("case5", jax.block_until_ready(time_attention(x5, w1b, w2b)),
           time_attention_ref(x5, w1b, w2b), 1e-4)

    # 6) bf16, C=64, ragged (S=150, tile_s=128) -> masked MXU boundary chunk.
    x6 = jax.random.normal(kx, (2, Cb, 3, 5, 10), dtype=jnp.bfloat16)
    _check("case6", jax.block_until_ready(time_attention(x6, w1b, w2b, tile_s=128)),
           time_attention_ref(x6, w1b, w2b), 1e-4)

    print("KERNEL_OK")
</pallas_src>

<mosaic_0001>
module attributes {stable_mosaic.version = 11 : i64} {
  func.func @kernel(%arg0: i32, %arg1: i32, %arg2: memref<1x8x256xf32, #tpu.memory_space<vmem>>, %arg3: memref<2x8xf32, #tpu.memory_space<vmem>>, %arg4: memref<8x2xf32, #tpu.memory_space<vmem>>, %arg5: memref<1x8x1xf32, #tpu.memory_space<vmem>>, %arg6: memref<8x256xf32, #tpu.memory_space<vmem>>, %arg7: memref<8x256xf32, #tpu.memory_space<vmem>>) attributes {dimension_semantics = [#tpu.dimension_semantics<parallel>, #tpu.dimension_semantics<arbitrary>], iteration_bounds = array<i64: 2, 1>, scalar_prefetch = 0 : i64, scratch_operands = 2 : i64, tpu.core_type = #tpu.core_type<tc>, window_params = [{transform_indices = @transform_0, window_bounds = array<i64: 1, 8, 256>}, {pipeline_mode = #tpu.pipeline_mode<synchronous>, transform_indices = @transform_1, window_bounds = array<i64: 2, 8>}, {pipeline_mode = #tpu.pipeline_mode<synchronous>, transform_indices = @transform_2, window_bounds = array<i64: 8, 2>}, {transform_indices = @transform_3, window_bounds = array<i64: 1, 8, 1>}]} {
    %c0_i32 = arith.constant 0 : i32
    %0 = arith.cmpi eq, %arg1, %c0_i32 : i32
    %1 = arith.extui %0 : i1 to i32
    %c0_i32_0 = arith.constant 0 : i32
    %2 = arith.cmpi ne, %1, %c0_i32_0 : i32
    scf.if %2 {
      %cst = arith.constant 0.000000e+00 : f32
      %14 = vector.broadcast %cst : f32 to vector<8x256xf32>
      %c0_13 = arith.constant 0 : index
      %c0_14 = arith.constant 0 : index
      %15 = vector.load %arg6[%c0_13, %c0_14] : memref<8x256xf32, #tpu.memory_space<vmem>>, vector<8x256xf32>
      tpu.vector_store %arg6[%c0_13, %c0_14], %14 {strides = array<i32>} : memref<8x256xf32, #tpu.memory_space<vmem>>, vector<8x256xf32>,
      %cst_15 = arith.constant 0xFF800000 : f32
      %16 = vector.broadcast %cst_15 : f32 to vector<8x256xf32>
      %c0_16 = arith.constant 0 : index
      %c0_17 = arith.constant 0 : index
      %17 = vector.load %arg7[%c0_16, %c0_17] : memref<8x256xf32, #tpu.memory_space<vmem>>, vector<8x256xf32>
      tpu.vector_store %arg7[%c0_16, %c0_17], %16 {strides = array<i32>} : memref<8x256xf32, #tpu.memory_space<vmem>>, vector<8x256xf32>,
    } else {
    }
    %c0 = arith.constant 0 : index
    %c0_1 = arith.constant 0 : index
    %c0_2 = arith.constant 0 : index
    %3 = vector.load %arg2[%c0, %c0_1, %c0_2] : memref<1x8x256xf32, #tpu.memory_space<vmem>>, vector<1x8x256xf32>
    %4 = vector.shape_cast %3 : vector<1x8x256xf32> to vector<8x256xf32>
    %c0_3 = arith.constant 0 : index
    %c0_4 = arith.constant 0 : index
    %5 = vector.load %arg7[%c0_3, %c0_4] : memref<8x256xf32, #tpu.memory_space<vmem>>, vector<8x256xf32>
    %6 = arith.maximumf %5, %4 : vector<8x256xf32>
    %c0_5 = arith.constant 0 : index
    %c0_6 = arith.constant 0 : index
    %7 = vector.load %arg7[%c0_5, %c0_6] : memref<8x256xf32, #tpu.memory_space<vmem>>, vector<8x256xf32>
    tpu.vector_store %arg7[%c0_5, %c0_6], %6 {strides = array<i32>} : memref<8x256xf32, #tpu.memory_space<vmem>>, vector<8x256xf32>,
    %c0_7 = arith.constant 0 : index
    %c0_8 = arith.constant 0 : index
    %8 = vector.load %arg6[%c0_7, %c0_8] : memref<8x256xf32, #tpu.memory_space<vmem>>, vector<8x256xf32>
    %9 = arith.addf %8, %4 : vector<8x256xf32>
    %c0_9 = arith.constant 0 : index
    %c0_10 = arith.constant 0 : index
    %10 = vector.load %arg6[%c0_9, %c0_10] : memref<8x256xf32, #tpu.memory_space<vmem>>, vector<8x256xf32>
    tpu.vector_store %arg6[%c0_9, %c0_10], %9 {strides = array<i32>} : memref<8x256xf32, #tpu.memory_space<vmem>>, vector<8x256xf32>,
    %c0_i32_11 = arith.constant 0 : i32
    %11 = arith.cmpi eq, %arg1, %c0_i32_11 : i32
    %12 = arith.extui %11 : i1 to i32
    %c0_i32_12 = arith.constant 0 : i32
    %13 = arith.cmpi ne, %12, %c0_i32_12 : i32
    scf.if %13 {
      %c0_13 = arith.constant 0 : index
      %c0_14 = arith.constant 0 : index
      %14 = vector.load %arg6[%c0_13, %c0_14] : memref<8x256xf32, #tpu.memory_space<vmem>>, vector<8x256xf32>
      %cst = arith.constant dense<0.000000e+00> : vector<8xf32>
      %15 = vector.multi_reduction <add>, %14, %cst [1] : vector<8x256xf32> to vector<8xf32>
      %16 = vector.shape_cast %15 : vector<8xf32> to vector<8x1xf32>
      %c0_15 = arith.constant 0 : index
      %c0_16 = arith.constant 0 : index
      %17 = vector.load %arg7[%c0_15, %c0_16] : memref<8x256xf32, #tpu.memory_space<vmem>>, vector<8x256xf32>
      %cst_17 = arith.constant dense<0xFF800000> : vector<8xf32>
      %18 = vector.multi_reduction <maximumf>, %17, %cst_17 [1] : vector<8x256xf32> to vector<8xf32>
      %19 = vector.shape_cast %18 : vector<8xf32> to vector<8x1xf32>
      %cst_18 = arith.constant 3.906250e-03 : f32
      %20 = vector.broadcast %cst_18 : f32 to vector<8x1xf32>
      %21 = arith.mulf %16, %20 : vector<8x1xf32>
      %c0_19 = arith.constant 0 : index
      %c0_20 = arith.constant 0 : index
      %22 = vector.load %arg3[%c0_19, %c0_20] : memref<2x8xf32, #tpu.memory_space<vmem>>, vector<2x8xf32>
      %cst_21 = arith.constant dense<0.000000e+00> : vector<2x1xf32>
      %23 = tpu.matmul %22, %21, %cst_21 {dimension_numbers = #tpu.dot_dimension_numbers<[1], [0], [0], [1], [0, 0, 1, 1], [], []>} : vector<2x8xf32>, vector<8x1xf32>, vector<2x1xf32> -> vector<2x1xf32>
      %cst_22 = arith.constant 0.000000e+00 : f32
      %24 = vector.broadcast %cst_22 : f32 to vector<2x1xf32>
      %25 = arith.maximumf %23, %24 : vector<2x1xf32>
      %cst_23 = arith.constant dense<0.000000e+00> : vector<2x1xf32>
      %26 = tpu.matmul %22, %19, %cst_23 {dimension_numbers = #tpu.dot_dimension_numbers<[1], [0], [0], [1], [0, 0, 1, 1], [], []>} : vector<2x8xf32>, vector<8x1xf32>, vector<2x1xf32> -> vector<2x1xf32>
      %cst_24 = arith.constant 0.000000e+00 : f32
      %27 = vector.broadcast %cst_24 : f32 to vector<2x1xf32>
      %28 = arith.maximumf %26, %27 : vector<2x1xf32>
      %29 = arith.addf %25, %28 : vector<2x1xf32>
      %c0_25 = arith.constant 0 : index
      %c0_26 = arith.constant 0 : index
      %30 = vector.load %arg4[%c0_25, %c0_26] : memref<8x2xf32, #tpu.memory_space<vmem>>, vector<8x2xf32>
      %cst_27 = arith.constant dense<0.000000e+00> : vector<8x1xf32>
      %31 = tpu.matmul %30, %29, %cst_27 {dimension_numbers = #tpu.dot_dimension_numbers<[1], [0], [0], [1], [0, 0, 1, 1], [], []>} : vector<8x2xf32>, vector<2x1xf32>, vector<8x1xf32> -> vector<8x1xf32>
      %32 = arith.negf %31 : vector<8x1xf32>
      %33 = math.exp %32 : vector<8x1xf32>
      %cst_28 = arith.constant 1.000000e+00 : f32
      %34 = vector.broadcast %cst_28 : f32 to vector<8x1xf32>
      %35 = arith.addf %34, %33 : vector<8x1xf32>
      %36 = arith.divf %34, %35 : vector<8x1xf32>
      %c0_29 = arith.constant 0 : index
      %c0_30 = arith.constant 0 : index
      %c0_31 = arith.constant 0 : index
      %37 = vector.load %arg5[%c0_29, %c0_30, %c0_31] : memref<1x8x1xf32, #tpu.memory_space<vmem>>, vector<1x8x1xf32>
      %38 = vector.shape_cast %37 : vector<1x8x1xf32> to vector<8x1xf32>
      %39 = vector.shape_cast %36 : vector<8x1xf32> to vector<1x8x1xf32>
      tpu.vector_store %arg5[%c0_29, %c0_30, %c0_31], %39 {strides = array<i32>} : memref<1x8x1xf32, #tpu.memory_space<vmem>>, vector<1x8x1xf32>,
    } else {
    }
    return
  }
  func.func @transform_0(%arg0: i32, %arg1: i32) -> (i32, i32, i32) {
    %c0_i32 = arith.constant 0 : i32
    %c0_i32_0 = arith.constant 0 : i32
    return %arg0, %c0_i32, %arg1 : i32, i32, i32
  }
  func.func @transform_1(%arg0: i32, %arg1: i32) -> (i32, i32) {
    %c0_i32 = arith.constant 0 : i32
    %c0_i32_0 = arith.constant 0 : i32
    %c0_i32_1 = arith.constant 0 : i32
    return %c0_i32, %c0_i32_0 : i32, i32
  }
  func.func @transform_2(%arg0: i32, %arg1: i32) -> (i32, i32) {
    %c0_i32 = arith.constant 0 : i32
    %c0_i32_0 = arith.constant 0 : i32
    %c0_i32_1 = arith.constant 0 : i32
    return %c0_i32, %c0_i32_0 : i32, i32
  }
  func.func @transform_3(%arg0: i32, %arg1: i32) -> (i32, i32, i32) {
    %c0_i32 = arith.constant 0 : i32
    %c0_i32_0 = arith.constant 0 : i32
    %c0_i32_1 = arith.constant 0 : i32
    return %arg0, %c0_i32, %c0_i32_0 : i32, i32, i32
  }
}

</mosaic_0001>

<llo_original>
// kernel: tpu_custom_call.1
$region0: #{tpu_custom_call.1}
  #allocation0 [shape = 'u32[]', space=smem, size = 0x4, offset = 0x4, fixed_abs, tag = 'smem constant byte address 0x4 - core index']
  #allocation1 [shape = 'u32[144,128]{1,0:T(1,128)}', space=vmem, size = 0x12000, scoped, tag = 'internal scratch']
  #allocation2 [shape = 'f32[8,256]{1,0:T(8,128)}', space=vmem, size = 0x2000, scoped, tag = 'scratch operand']
  #allocation3 [shape = 'f32[8,256]{1,0:T(8,128)}', space=vmem, size = 0x2000, scoped, tag = 'scratch operand']
  %s0 = inlined_call_operand.hbm [shape: f32[2,8,256], index: 0, kind: input, shape index: {}]
  %s1 = inlined_call_operand.vmem [shape: f32[2,8], index: 1, kind: input, shape index: {}]
  %s2 = inlined_call_operand.vmem [shape: f32[8,2], index: 2, kind: input, shape index: {}]
  %s3 = inlined_call_operand.vmem [shape: f32[2,8,1], index: 3, kind: output, shape index: {}]
  %s4 = sld [smem:[#allocation0]]
  $region57: #{tpu_custom_call.1} parent=0
    _
  %s6 = ssub.s32 1, %s4
  %s7 = scalar_select 0, %s6, %s4
  $region1: #{tpu_custom_call.1} parent=0
    #allocation4 [shape = 'u8[16384]{0}', space=vmem, size = 0x4000, scoped, tag = 'input window, operand 0']
    #allocation5 [shape = 's32[2]{0}', space=sflag, size = 0x8, scoped, tag = 'scoped memory for tpu_custom_call.1']
    %8 = vsyncpa [#allocation5], 0
    %s9 = scalar_lea.sflag [#allocation5], 1
    %10 = vsyncpa %s9, 0
    loop: start=0, step=1, limit=4
    $region2: #{tpu_custom_call.1} parent=1 // loop_pre_header
      _
    $region3: #{tpu_custom_call.1} parent=1 // loop_header
      %s12 = sphi 0, %s16
      %p13 = scmp.ge.s32.totalorder %s12, 4
      %s19 = sphi 0, %s31
      %s20 = sphi 0, %s27
      %s21 = sphi 0, %s19
      %s22 = sphi 0, %s20
      %s23 = sphi 0, %s21
      %s24 = sphi 0, %s22
      %s36 = sphi 0, %s38
      %s39 = sphi 0, %s36
      %s40 = sphi 0, %s39
      %s56 = sphi 0, %s40
      %s60 = sphi 0, %s60
      %s62 = sphi 0, %s60
      %s63 = sphi 0, %s62
      %s77 = sphi 0, %s63
      %s81 = sphi 0, %s81
      %s83 = sphi 0, %s81
      %s84 = sphi 0, %s83
      %s98 = sphi 0, %s84
      %s104 = sphi 0, %s106
      %s107 = sphi 0, %s104
      %s108 = sphi 0, %s107
      %s124 = sphi 0, %s108
    $region4: #{tpu_custom_call.1} parent=1 // loop_header_branch
      %15 = sbr.rel (%p13) target = $region8
    $region5: #{tpu_custom_call.1} parent=1 // loop_body
      %s17 = ssub.s32 %s12, 1
      %s18 = ssub.s32 %s12, 2
      %s25 = sadd.s32 1, %s20
      %p26 = scmp.ge.s32.totalorder %s25, 1
      %s27 = scalar_select %p26, 0, %s25
      %s28 = sadd.s32 1, %s19
      %s29 = scalar_select %p26, %s28, %s19
      %p30 = scmp.ge.s32.totalorder %s29, 2
      %s31 = scalar_select %p30, 0, %s29
      %s32 = ssub.s32 %s19, %s31
      %s33 = ssub.s32 %s20, %s27
      %s34 = sor.u32 %s32, %s33
      %p35 = scmp.eq.s32.totalorder %s34, 0
      %s37 = sadd.s32 %s36, 1
      %s38 = scalar_select %p35, %s36, %s37
      %p41 = pneg %p35
      %p42 = scmp.eq.s32.totalorder %s12, 1
      %p43 = por %p41, %p42
      %p44 = scmp.ne.s32.totalorder %s36, %s39
      %p45 = scmp.eq.s32.totalorder %s12, 0
      %p46 = por %p44, %p45
      %p47 = scmp.ne.s32.totalorder %s36, %s39
      %p48 = scmp.eq.s32.totalorder %s17, 1
      %p49 = por %p47, %p48
      %p50 = scmp.ne.s32.totalorder %s39, %s40
      %p51 = scmp.eq.s32.totalorder %s17, 0
      %p52 = por %p50, %p51
      %p53 = scmp.ne.s32.totalorder %s39, %s40
      %p54 = scmp.eq.s32.totalorder %s18, 1
      %p55 = por %p53, %p54
      %p57 = scmp.ne.s32.totalorder %s40, %s56
      %p58 = scmp.eq.s32.totalorder %s18, 0
      %p59 = por %p57, %p58
      %s61 = sadd.s32 %s60, 1
      %p64 = scmp.eq.s32.totalorder %s12, 1
      %p65 = scmp.ne.s32.totalorder %s60, %s62
      %p66 = scmp.eq.s32.totalorder %s12, 0
      %p67 = por %p65, %p66
      %p68 = scmp.ne.s32.totalorder %s60, %s62
      %p69 = scmp.eq.s32.totalorder %s17, 1
      %p70 = por %p68, %p69
      %p71 = scmp.ne.s32.totalorder %s62, %s63
      %p72 = scmp.eq.s32.totalorder %s17, 0
      %p73 = por %p71, %p72
      %p74 = scmp.ne.s32.totalorder %s62, %s63
      %p75 = scmp.eq.s32.totalorder %s18, 1
      %p76 = por %p74, %p75
      %p78 = scmp.ne.s32.totalorder %s63, %s77
      %p79 = scmp.eq.s32.totalorder %s18, 0
      %p80 = por %p78, %p79
      %s82 = sadd.s32 %s81, 1
      %p85 = scmp.eq.s32.totalorder %s12, 1
      %p86 = scmp.ne.s32.totalorder %s81, %s83
      %p87 = scmp.eq.s32.totalorder %s12, 0
      %p88 = por %p86, %p87
      %p89 = scmp.ne.s32.totalorder %s81, %s83
      %p90 = scmp.eq.s32.totalorder %s17, 1
      %p91 = por %p89, %p90
      %p92 = scmp.ne.s32.totalorder %s83, %s84
      %p93 = scmp.eq.s32.totalorder %s17, 0
      %p94 = por %p92, %p93
      %p95 = scmp.ne.s32.totalorder %s83, %s84
      %p96 = scmp.eq.s32.totalorder %s18, 1
      %p97 = por %p95, %p96
      %p99 = scmp.ne.s32.totalorder %s84, %s98
      %p100 = scmp.eq.s32.totalorder %s18, 0
      %p101 = por %p99, %p100
      %s102 = ssub.s32 %s19, %s31
      %p103 = scmp.eq.s32.totalorder %s102, 0
      %s105 = sadd.s32 %s104, 1
      %s106 = scalar_select %p103, %s104, %s105
      %p109 = pneg %p103
      %p110 = scmp.eq.s32.totalorder %s12, 1
      %p111 = por %p109, %p110
      %p112 = scmp.ne.s32.totalorder %s104, %s107
      %p113 = scmp.eq.s32.totalorder %s12, 0
      %p114 = por %p112, %p113
      %p115 = scmp.ne.s32.totalorder %s104, %s107
      %p116 = scmp.eq.s32.totalorder %s17, 1
      %p117 = por %p115, %p116
      %p118 = scmp.ne.s32.totalorder %s107, %s108
      %p119 = scmp.eq.s32.totalorder %s17, 0
      %p120 = por %p118, %p119
      %p121 = scmp.ne.s32.totalorder %s107, %s108
      %p122 = scmp.eq.s32.totalorder %s18, 1
      %p123 = por %p121, %p122
      %p125 = scmp.ne.s32.totalorder %s108, %s124
      %p126 = scmp.eq.s32.totalorder %s18, 0
      %p127 = por %p125, %p126
      %p128 = scmp.le.s32.totalorder 1, %s12
      %p129 = scmp.lt.s32.totalorder %s12, 3
      %p130 = pnand %p128, %p129
      %p131 = pneg %p130
      // Predicated region
      $region9: #{tpu_custom_call.1} parent=5 // pred_check
        _
      $region10: #{tpu_custom_call.1} parent=5 // pred_check_branch
        %133 = sbr.rel (%p130) target = $region12
      $region11: #{tpu_custom_call.1} parent=5 // pred_region
        %s134 = ssub.s32 %s12, 1
        // Predicated region
        $region13: #{tpu_custom_call.1} parent=11 // pred_check
          %p135 = pneg %p73
        $region14: #{tpu_custom_call.1} parent=11 // pred_check_branch
          %137 = sbr.rel (%p135) target = $region16
        $region15: #{tpu_custom_call.1} parent=11 // pred_region
          _
        $region16: #{tpu_custom_call.1} parent=11 // pred_fallthru
          _
        // Predicated region
        $region17: #{tpu_custom_call.1} parent=11 // pred_check
          %p138 = pneg %p94
        $region18: #{tpu_custom_call.1} parent=11 // pred_check_branch
          %140 = sbr.rel (%p138) target = $region20
        $region19: #{tpu_custom_call.1} parent=11 // pred_region
          _
        $region20: #{tpu_custom_call.1} parent=11 // pred_fallthru
          _
      $region12: #{tpu_custom_call.1} parent=5 // pred_fallthru
        _
      %p141 = scmp.lt.s32.totalorder %s12, 2
      // Predicated region
      $region21: #{tpu_custom_call.1} parent=5 // pred_check
        %p142 = pneg %p141
      $region22: #{tpu_custom_call.1} parent=5 // pred_check_branch
        %144 = sbr.rel (%p142) target = $region24
      $region23: #{tpu_custom_call.1} parent=5 // pred_region
        // Predicated region
        $region25: #{tpu_custom_call.1} parent=23 // pred_check
          %p145 = pneg %p46
        $region26: #{tpu_custom_call.1} parent=23 // pred_check_branch
          %147 = sbr.rel (%p145) target = $region28
        $region27: #{tpu_custom_call.1} parent=23 // pred_region
          %s148 = sand.u32 %s36, 1
          %s149 = scalar_lea.sflag [#allocation5], %s148
          %s150 = sand.u32 %s36, 1
          %s151 = smul.addr %s150, 16
          %s152 = scalar_lea.vmem [#allocation4], %s151
          %s153 = smul.u32 2, %s20
          %s155 = ssub.s32 256, 256
          %156 = vsyncadd %s149, %s155
          %s157 = smul.addr %s19, 2
          %s158 = sadd.s32 %s153, %s157
          %s159 = smul.addr %s158, 128
          %s160 = scalar_lea.hbm %s0, %s159
          %s162 = sshll.u32 %s152, 4
          %s163 = int_to_ptr.vmem [resolvable:$true] %s162
          %165 = dma.hbm_to_vmem [thread:$0]  %s160, 256, %s163, %s149
        $region28: #{tpu_custom_call.1} parent=23 // pred_fallthru
          _
      $region24: #{tpu_custom_call.1} parent=5 // pred_fallthru
        _
      %p166 = scmp.le.s32.totalorder 1, %s12
      %p167 = scmp.lt.s32.totalorder %s12, 3
      %p168 = pnand %p166, %p167
      %p169 = pneg %p168
      // Predicated region
      $region29: #{tpu_custom_call.1} parent=5 // pred_check
        _
      $region30: #{tpu_custom_call.1} parent=5 // pred_check_branch
        %171 = sbr.rel (%p168) target = $region32
      $region31: #{tpu_custom_call.1} parent=5 // pred_region
        %s172 = ssub.s32 %s12, 1
        %s173 = sand.u32 %s39, 1
        %s174 = scalar_lea.sflag [#allocation5], %s173
        %s175 = sand.u32 %s39, 1
        %s176 = smul.addr %s175, 16
        %s177 = scalar_lea.vmem [#allocation4], %s176
        // Predicated region
        $region33: #{tpu_custom_call.1} parent=31 // pred_check
          %p178 = pneg %p52
        $region34: #{tpu_custom_call.1} parent=31 // pred_check_branch
          %180 = sbr.rel (%p178) target = $region36
        $region35: #{tpu_custom_call.1} parent=31 // pred_region
          %181 = dma.done %s174, 256
        $region36: #{tpu_custom_call.1} parent=31 // pred_fallthru
          _
        %s182 = sand.u32 %s39, 1
        %s183 = scalar_lea.sflag [#allocation5], %s182
        %s184 = sand.u32 %s39, 1
        %s185 = smul.addr %s184, 16
        %s186 = scalar_lea.vmem [#allocation4], %s185
        %p187 = pneg %p52
        %p188 = pneg %p49
        %p189 = pneg %p73
        %p190 = pneg %p70
        %p191 = pneg %p94
        %p192 = pneg %p91
        %p193 = pneg %p120
        %p194 = pneg %p117
        %p195 = scmp.lt.s32.totalorder %s21, 1
        %s196 = scalar_select %p195, %s21, 1
        %s197 = smul.addr %s196, 8
        %s198 = scalar_lea.vmem %s3, %s197
        %s199 = smul.u32 2, %s22
        %p200 = scmp.lt.s32.totalorder %s21, 1
        %s201 = scalar_select %p200, %s21, 1
        %s202 = smul.addr %s201, 8
        %s203 = scalar_lea.vmem %s3, %s202
        %p204 = scmp.eq.s32.totalorder %s22, 0
        // Predicated region
        $region37: #{tpu_custom_call.1} parent=31 // pred_check
          %p205 = pneg %p204
        $region38: #{tpu_custom_call.1} parent=31 // pred_check_branch
          %207 = sbr.rel (%p205) target = $region40
        $region39: #{tpu_custom_call.1} parent=31 // pred_region
          %208 = vst [vmem:[#allocation2] sm:$0xff] 0.0
          %209 = vst [vmem:[#allocation2 + $0x8] sm:$0xff] 0.0
          %210 = vst [vmem:[#allocation3] sm:$0xff] -inf
          %211 = vst [vmem:[#allocation3 + $0x8] sm:$0xff] -inf
        $region40: #{tpu_custom_call.1} parent=31 // pred_fallthru
          _
        %v212 = vld [vmem:[%s177] sm:$0xff]
        %v213 = vld [vmem:[%s177 + $0x8] sm:$0xff]
        %v214 = vld [vmem:[#allocation3] sm:$0xff]
        %v215 = vld [vmem:[#allocation3 + $0x8] sm:$0xff]
        %v216 = vmax.f32 %v214, %v212
        %v217 = vmax.f32 %v215, %v213
        %218 = vst [vmem:[#allocation3] sm:$0xff] %v216
        %219 = vst [vmem:[#allocation3 + $0x8] sm:$0xff] %v217
        %v220 = vld [vmem:[#allocation2] sm:$0xff]
        %v221 = vld [vmem:[#allocation2 + $0x8] sm:$0xff]
        %v222 = vadd.f32 %v220, %v212
        %v223 = vadd.f32 %v221, %v213
        %224 = vst [vmem:[#allocation2] sm:$0xff] %v222
        %225 = vst [vmem:[#allocation2 + $0x8] sm:$0xff] %v223
        // Predicated region
        $region41: #{tpu_custom_call.1} parent=31 // pred_check
          %p226 = pneg %p204
        $region42: #{tpu_custom_call.1} parent=31 // pred_check_branch
          %228 = sbr.rel (%p226) target = $region44
        $region43: #{tpu_custom_call.1} parent=31 // pred_region
          %v229 = vld [vmem:[#allocation2] sm:$0xff]
          %v230 = vld [vmem:[#allocation2 + $0x8] sm:$0xff]
          %v231 = vadd.f32 %v229, %v230
          %232 = vadd.xlane.f32.xlu0 %v231
          %v233 = vpop.xlane.xlu0 %232
          %v234 = vld [vmem:[#allocation3] sm:$0xff]
          %v235 = vld [vmem:[#allocation3 + $0x8] sm:$0xff]
          %v236 = vmax.f32 %v234, %v235
          %237 = vmax.xlane.f32.xlu0 %v236
          %v238 = vpop.xlane.xlu0 %237
          %v239 = vmul.f32 %v233, 0.00390625
          %v240 = vld [vmem:[%s1] sm:$0x3]
          %vm241 = vcmask 64512
          %v243 = vsel %vm241, %v240, 0
          %245 = vmatprep.subr.mxu0 0.0
          %246 = vmatpush1.msra.mxu0 0.0
          %247 = vmatprep.subr.mxu0 0.0
          %248 = vmatpush1.msra.mxu0 0.0
          %249 = vmatprep.subr.mxu0 0.0
          %250 = vmatpush1.msra.mxu0 0.0
          %251 = vmatprep.subr.mxu0 0.0
          %252 = vmatpush1.msra.mxu0 0.0
          %253 = vmatprep.subr.mxu0 0.0
          %254 = vmatpush1.msra.mxu0 0.0
          %255 = vmatprep.subr.mxu0 0.0
          %256 = vmatpush1.msra.mxu0 0.0
          %257 = vmatprep.subr.mxu0 0.0
          %258 = vmatpush1.msra.mxu0 0.0
          %259 = vmatprep.subr.mxu0 0.0
          %260 = vmatpush1.msra.mxu0 0.0
          %261 = vmatprep.subr.mxu0 0.0
          %262 = vmatpush1.msra.mxu0 0.0
          %263 = vmatprep.subr.mxu0 0.0
          %264 = vmatpush1.msra.mxu0 0.0
          %265 = vmatprep.subr.mxu0 0.0
          %266 = vmatpush1.msra.mxu0 0.0
          %267 = vmatprep.subr.mxu0 0.0
          %268 = vmatpush1.msra.mxu0 0.0
          %269 = vmatprep.subr.mxu0 0.0
          %270 = vmatpush1.msra.mxu0 0.0
          %271 = vmatprep.subr.mxu0 0.0
          %272 = vmatpush1.msra.mxu0 0.0
          %273 = vmatprep.subr.mxu0 0.0
          %274 = vmatpush1.msra.mxu0 0.0
          %275 = vmatprep.subr.mxu0 0.0
          %276 = vmatpush1.msra.mxu0 %v239
          %277 = vmatprep.subr.mxu0 0.0
          %278 = vmatpush2.msra.mxu0 0.0
          %279 = vmatprep.subr.mxu0 0.0
          %280 = vmatpush2.msra.mxu0 0.0
          %281 = vmatprep.subr.mxu0 0.0
          %282 = vmatpush2.msra.mxu0 0.0
          %283 = vmatprep.subr.mxu0 0.0
          %284 = vmatpush2.msra.mxu0 0.0
          %285 = vmatprep.subr.mxu0 0.0
          %286 = vmatpush2.msra.mxu0 0.0
          %287 = vmatprep.subr.mxu0 0.0
          %288 = vmatpush2.msra.mxu0 0.0
          %289 = vmatprep.subr.mxu0 0.0
          %290 = vmatpush2.msra.mxu0 0.0
          %291 = vmatprep.subr.mxu0 0.0
          %292 = vmatpush2.msra.mxu0 0.0
          %293 = vmatprep.subr.mxu0 0.0
          %294 = vmatpush2.msra.mxu0 0.0
          %295 = vmatprep.subr.mxu0 0.0
          %296 = vmatpush2.msra.mxu0 0.0
          %297 = vmatprep.subr.mxu0 0.0
          %298 = vmatpush2.msra.mxu0 0.0
          %299 = vmatprep.subr.mxu0 0.0
          %300 = vmatpush2.msra.mxu0 0.0
          %301 = vmatprep.subr.mxu0 0.0
          %302 = vmatpush2.msra.mxu0 0.0
          %303 = vmatprep.subr.mxu0 0.0
          %304 = vmatpush2.msra.mxu0 0.0
          %305 = vmatprep.subr.mxu0 0.0
          %306 = vmatpush2.msra.mxu0 0.0
          %307 = vmatprep.subr.mxu0 0.0
          %308 = vmatpush2.msra.mxu0 0.0
          %309 = vmatprep.mubr.f32.mxu0 0.0
          %310 = vmatmul.mubr.f32.gmra.mxu0 %v243
          %v311 = vpop.f32.mrf.mxu0
          %v312 = vadd.f32 0.0, %v311
          %v313 = vpop.f32.mrf.mxu0
          %314 = vdwg.mxu0
          %v315 = vmax.f32 %v312, 0.0
          %316 = vmatprep.subr.mxu0 0.0
          %317 = vmatpush1.msra.mxu0 0.0
          %318 = vmatprep.subr.mxu0 0.0
          %319 = vmatpush1.msra.mxu0 0.0
          %320 = vmatprep.subr.mxu0 0.0
          %321 = vmatpush1.msra.mxu0 0.0
          %322 = vmatprep.subr.mxu0 0.0
          %323 = vmatpush1.msra.mxu0 0.0
          %324 = vmatprep.subr.mxu0 0.0
          %325 = vmatpush1.msra.mxu0 0.0
          %326 = vmatprep.subr.mxu0 0.0
          %327 = vmatpush1.msra.mxu0 0.0
          %328 = vmatprep.subr.mxu0 0.0
          %329 = vmatpush1.msra.mxu0 0.0
          %330 = vmatprep.subr.mxu0 0.0
          %331 = vmatpush1.msra.mxu0 0.0
          %332 = vmatprep.subr.mxu0 0.0
          %333 = vmatpush1.msra.mxu0 0.0
          %334 = vmatprep.subr.mxu0 0.0
          %335 = vmatpush1.msra.mxu0 0.0
          %336 = vmatprep.subr.mxu0 0.0
          %337 = vmatpush1.msra.mxu0 0.0
          %338 = vmatprep.subr.mxu0 0.0
          %339 = vmatpush1.msra.mxu0 0.0
          %340 = vmatprep.subr.mxu0 0.0
          %341 = vmatpush1.msra.mxu0 0.0
          %342 = vmatprep.subr.mxu0 0.0
          %343 = vmatpush1.msra.mxu0 0.0
          %344 = vmatprep.subr.mxu0 0.0
          %345 = vmatpush1.msra.mxu0 0.0
          %346 = vmatprep.subr.mxu0 0.0
          %347 = vmatpush1.msra.mxu0 %v238
          %348 = vmatprep.subr.mxu0 0.0
          %349 = vmatpush2.msra.mxu0 0.0
          %350 = vmatprep.subr.mxu0 0.0
          %351 = vmatpush2.msra.mxu0 0.0
          %352 = vmatprep.subr.mxu0 0.0
          %353 = vmatpush2.msra.mxu0 0.0
          %354 = vmatprep.subr.mxu0 0.0
          %355 = vmatpush2.msra.mxu0 0.0
          %356 = vmatprep.subr.mxu0 0.0
          %357 = vmatpush2.msra.mxu0 0.0
          %358 = vmatprep.subr.mxu0 0.0
          %359 = vmatpush2.msra.mxu0 0.0
          %360 = vmatprep.subr.mxu0 0.0
          %361 = vmatpush2.msra.mxu0 0.0
          %362 = vmatprep.subr.mxu0 0.0
          %363 = vmatpush2.msra.mxu0 0.0
          %364 = vmatprep.subr.mxu0 0.0
          %365 = vmatpush2.msra.mxu0 0.0
          %366 = vmatprep.subr.mxu0 0.0
          %367 = vmatpush2.msra.mxu0 0.0
          %368 = vmatprep.subr.mxu0 0.0
          %369 = vmatpush2.msra.mxu0 0.0
          %370 = vmatprep.subr.mxu0 0.0
          %371 = vmatpush2.msra.mxu0 0.0
          %372 = vmatprep.subr.mxu0 0.0
          %373 = vmatpush2.msra.mxu0 0.0
          %374 = vmatprep.subr.mxu0 0.0
          %375 = vmatpush2.msra.mxu0 0.0
          %376 = vmatprep.subr.mxu0 0.0
          %377 = vmatpush2.msra.mxu0 0.0
          %378 = vmatprep.subr.mxu0 0.0
          %379 = vmatpush2.msra.mxu0 0.0
          %380 = vmatprep.mubr.f32.mxu0 0.0
          %381 = vmatmul.mubr.f32.gmra.mxu0 %v243
          %v382 = vpop.f32.mrf.mxu0
          %v383 = vadd.f32 0.0, %v382
          %v384 = vpop.f32.mrf.mxu0
          %385 = vdwg.mxu0
          %v386 = vmax.f32 %v383, 0.0
          %v387 = vadd.f32 %v315, %v386
          %v388 = vld [vmem:[%s2] sm:$0xff]
          %vm389 = vcmask 15360
          %v391 = vsel %vm389, %v388, 0
          %vm393 = vcmask 1041408
          %v395 = vsel %vm393, %v387, 0
          %397 = vmatprep.subr.mxu0 0.0
          %398 = vmatpush1.msra.mxu0 0.0
          %399 = vmatprep.subr.mxu0 0.0
          %400 = vmatpush1.msra.mxu0 0.0
          %401 = vmatprep.subr.mxu0 0.0
          %402 = vmatpush1.msra.mxu0 0.0
          %403 = vmatprep.subr.mxu0 0.0
          %404 = vmatpush1.msra.mxu0 0.0
          %405 = vmatprep.subr.mxu0 0.0
          %406 = vmatpush1.msra.mxu0 0.0
          %407 = vmatprep.subr.mxu0 0.0
          %408 = vmatpush1.msra.mxu0 0.0
          %409 = vmatprep.subr.mxu0 0.0
          %410 = vmatpush1.msra.mxu0 0.0
          %411 = vmatprep.subr.mxu0 0.0
          %412 = vmatpush1.msra.mxu0 0.0
          %413 = vmatprep.subr.mxu0 0.0
          %414 = vmatpush1.msra.mxu0 0.0
          %415 = vmatprep.subr.mxu0 0.0
          %416 = vmatpush1.msra.mxu0 0.0
          %417 = vmatprep.subr.mxu0 0.0
          %418 = vmatpush1.msra.mxu0 0.0
          %419 = vmatprep.subr.mxu0 0.0
          %420 = vmatpush1.msra.mxu0 0.0
          %421 = vmatprep.subr.mxu0 0.0
          %422 = vmatpush1.msra.mxu0 0.0
          %423 = vmatprep.subr.mxu0 0.0
          %424 = vmatpush1.msra.mxu0 0.0
          %425 = vmatprep.subr.mxu0 0.0
          %426 = vmatpush1.msra.mxu0 0.0
          %427 = vmatprep.subr.mxu0 0.0
          %428 = vmatpush1.msra.mxu0 %v395
          %429 = vmatprep.subr.mxu0 0.0
          %430 = vmatpush2.msra.mxu0 0.0
          %431 = vmatprep.subr.mxu0 0.0
          %432 = vmatpush2.msra.mxu0 0.0
          %433 = vmatprep.subr.mxu0 0.0
          %434 = vmatpush2.msra.mxu0 0.0
          %435 = vmatprep.subr.mxu0 0.0
          %436 = vmatpush2.msra.mxu0 0.0
          %437 = vmatprep.subr.mxu0 0.0
          %438 = vmatpush2.msra.mxu0 0.0
          %439 = vmatprep.subr.mxu0 0.0
          %440 = vmatpush2.msra.mxu0 0.0
          %441 = vmatprep.subr.mxu0 0.0
          %442 = vmatpush2.msra.mxu0 0.0
          %443 = vmatprep.subr.mxu0 0.0
          %444 = vmatpush2.msra.mxu0 0.0
          %445 = vmatprep.subr.mxu0 0.0
          %446 = vmatpush2.msra.mxu0 0.0
          %447 = vmatprep.subr.mxu0 0.0
          %448 = vmatpush2.msra.mxu0 0.0
          %449 = vmatprep.subr.mxu0 0.0
          %450 = vmatpush2.msra.mxu0 0.0
          %451 = vmatprep.subr.mxu0 0.0
          %452 = vmatpush2.msra.mxu0 0.0
          %453 = vmatprep.subr.mxu0 0.0
          %454 = vmatpush2.msra.mxu0 0.0
          %455 = vmatprep.subr.mxu0 0.0
          %456 = vmatpush2.msra.mxu0 0.0
          %457 = vmatprep.subr.mxu0 0.0
          %458 = vmatpush2.msra.mxu0 0.0
          %459 = vmatprep.subr.mxu0 0.0
          %460 = vmatpush2.msra.mxu0 0.0
          %461 = vmatprep.mubr.f32.mxu0 0.0
          %462 = vmatmul.mubr.f32.gmra.mxu0 %v391
          %v463 = vpop.f32.mrf.mxu0
          %v464 = vadd.f32 0.0, %v463
          %v465 = vpop.f32.mrf.mxu0
          %466 = vdwg.mxu0
          %v467 = vxor.u32 %v464, 2147483648
          %v468 = vmul.f32 %v467, 1.442695
          %v469 = vpow.pop %v468
          %v470 = vadd.f32 %v469, 1.0
          %v471 = vrcp.pop %v470
          %v472 = vmul.f32 1.0, %v471
          %vm473 = vcmask 7168
          %474 = vst.msk [vmem:[%s203] sm:$0xff] %vm473, %v472
        $region44: #{tpu_custom_call.1} parent=31 // pred_fallthru
          _
        %p475 = scmp.lt.s32.totalorder %s21, 1
        %s476 = scalar_select %p475, %s21, 1
        %s477 = smul.addr %s476, 8
        %s478 = scalar_lea.vmem %s3, %s477
        // Predicated region
        $region45: #{tpu_custom_call.1} parent=31 // pred_check
          %p479 = pneg %p117
        $region46: #{tpu_custom_call.1} parent=31 // pred_check_branch
          %481 = sbr.rel (%p479) target = $region48
        $region47: #{tpu_custom_call.1} parent=31 // pred_region
          _
        $region48: #{tpu_custom_call.1} parent=31 // pred_fallthru
          _
      $region32: #{tpu_custom_call.1} parent=5 // pred_fallthru
        _
      %p482 = scmp.le.s32.totalorder 2, %s12
      // Predicated region
      $region49: #{tpu_custom_call.1} parent=5 // pred_check
        %p483 = pneg %p482
      $region50: #{tpu_custom_call.1} parent=5 // pred_check_branch
        %485 = sbr.rel (%p483) target = $region52
      $region51: #{tpu_custom_call.1} parent=5 // pred_region
        %s486 = ssub.s32 %s12, 2
        // Predicated region
        $region53: #{tpu_custom_call.1} parent=51 // pred_check
          %p487 = pneg %p123
        $region54: #{tpu_custom_call.1} parent=51 // pred_check_branch
          %489 = sbr.rel (%p487) target = $region56
        $region55: #{tpu_custom_call.1} parent=51 // pred_region
          %p490 = scmp.lt.s32.totalorder %s23, 1
          %s491 = scalar_select %p490, %s23, 1
          %s492 = smul.addr %s491, 8
          %s493 = scalar_lea.vmem %s3, %s492
        $region56: #{tpu_custom_call.1} parent=51 // pred_fallthru
          _
      $region52: #{tpu_custom_call.1} parent=5 // pred_fallthru
        _
    $region6: #{tpu_custom_call.1} parent=1 // loop_footer
      %s16 = sadd.s32 1, %s12
    $region7: #{tpu_custom_call.1} parent=1 // loop_footer_branch
      %11 = sbr.rel target = $region3
    $region8: #{tpu_custom_call.1} parent=1 // loop_exit
      _
    %494 = vsyncpa [#allocation5], 1
    %s495 = scalar_lea.sflag [#allocation5], 1
    %496 = vsyncpa %s495, 1

</llo_original>
